<compile_context>
chip_gen: v5e
topology: v5e:2x2
jax: 0.10.0
libtpu: 0.0.40
codegen_flags: <defaults>
</compile_context>

<pallas_src>
import math
import numpy as np
import jax
import jax.numpy as jnp
from jax.experimental import pallas as pl
from jax.experimental.pallas import tpu as pltpu

LANE = 128
SUB = 8
BIG = 1e8  # padded-threshold sentinel (squared stays well inside f32 range)


def _rup(v, m):
    v = int(v)
    return max(m, ((v + m - 1) // m) * m)


def _bucket(v, m):
    """Round up to a multiple of m, then to the next power of two (shape
    bucketing -> fewer distinct padded shapes -> fewer pallas_call recompiles)."""
    r = _rup(v, m)
    return 1 << (int(r) - 1).bit_length()


# ----------------------------------------------------------------------------
# Kernel 1: fitness = tanh(x @ (w / ||w||_2))            (VPU + XLU reduce + EUP)
#   layout: features on sublanes, nodes on lanes -> lane-dense (1, TM) output.
# ----------------------------------------------------------------------------
def _fitness_kernel(xt_ref, w_ref, o_ref):
    w = w_ref[:, 0:1]                                      # (Cp, 1) pre-normalized
    s = jnp.sum(xt_ref[...] * w, axis=0, keepdims=True)    # (1, TM)
    o_ref[...] = jnp.tanh(s)


def fitness_pallas(x_sel, w):
    x_sel = jnp.asarray(x_sel, jnp.float32)
    w = jnp.asarray(w, jnp.float32)
    M, C = x_sel.shape
    Cp = _rup(C, SUB)
    Mp = _bucket(M, LANE)
    TM = min(512, Mp)
    xt = jnp.zeros((Cp, Mp), jnp.float32).at[:C, :M].set(x_sel.T)
    wn = (w / jnp.sqrt(jnp.sum(w * w)))[0]                 # host-side normalization
    wcol = jnp.zeros((Cp, LANE), jnp.float32).at[:C, 0].set(wn)
    out = pl.pallas_call(
        _fitness_kernel,
        grid=(Mp // TM,),
        in_specs=[pl.BlockSpec((Cp, TM), lambda i: (0, i)),
                  pl.BlockSpec((Cp, LANE), lambda i: (0, 0))],
        out_specs=pl.BlockSpec((1, TM), lambda i: (0, i)),
        out_shape=jax.ShapeDtypeStruct((1, Mp), jnp.float32),
        compiler_params=pltpu.CompilerParams(dimension_semantics=("parallel",)),
    )(xt, wcol)
    return out[0, :M]                                      # device array (M,)


# ----------------------------------------------------------------------------
# Kernel 2 (batched over groups, tiled over points):
#   cluster[m] = argmin_t ( ||thr_xy - p_xy||_2 + |thr_f - p_f| )
# ----------------------------------------------------------------------------
def _assign_kernel(thr_ref, pts_ref, o_ref):
    tx = thr_ref[:, 0:1]
    ty = thr_ref[:, 1:2]
    tf = thr_ref[:, 2:3]                                   # (Tp, 1)
    px = pts_ref[0:1, :]
    py = pts_ref[1:2, :]
    pf = pts_ref[2:3, :]                                   # (1, TM)
    d_xy = jnp.sqrt((tx - px) ** 2 + (ty - py) ** 2)       # (Tp, TM)  one EUP sqrt
    dist = d_xy + jnp.abs(tf - pf)                         # |.| on VPU (no 2nd sqrt)
    minv = jnp.min(dist, axis=0, keepdims=True)
    iota = jax.lax.broadcasted_iota(jnp.int32, dist.shape, 0)
    o_ref[...] = jnp.min(jnp.where(dist <= minv, iota, dist.shape[0]),
                         axis=0, keepdims=True)


def assign_pallas_batched(thr_groups, pts_groups):
    """One pallas_call for all groups: pad to common (Tp, Mp), grid over
    (group, point-tile) so large point counts stream/pipeline in 1024-lane tiles."""
    G = len(thr_groups)
    sizes = [int(np.asarray(p).shape[0]) for p in pts_groups]
    Tp = _rup(max(int(np.asarray(t).shape[0]) for t in thr_groups), SUB)
    Mp = _bucket(max(sizes), LANE)
    TM = min(1024, Mp)
    thr = np.full((G, Tp, LANE), BIG, np.float32)          # padded rows never win argmin
    pts = np.zeros((G, SUB, Mp), np.float32)
    for g in range(G):
        t = np.asarray(thr_groups[g], np.float32)
        p = np.asarray(pts_groups[g], np.float32)
        thr[g, : t.shape[0], :3] = t[:, :3]
        pts[g, 0, : p.shape[0]] = p[:, 0]
        pts[g, 1, : p.shape[0]] = p[:, 1]
        pts[g, 2, : p.shape[0]] = p[:, 2]
    out = pl.pallas_call(
        _assign_kernel,
        grid=(G, Mp // TM),
        in_specs=[pl.BlockSpec((None, Tp, LANE), lambda g, m: (g, 0, 0)),
                  pl.BlockSpec((None, SUB, TM), lambda g, m: (g, 0, m))],
        out_specs=pl.BlockSpec((None, 1, TM), lambda g, m: (g, 0, m)),
        out_shape=jax.ShapeDtypeStruct((G, 1, Mp), jnp.int32),
        compiler_params=pltpu.CompilerParams(
            dimension_semantics=("parallel", "parallel")),
    )(jnp.asarray(thr), jnp.asarray(pts))
    out = np.asarray(out)                                  # host needed for bookkeeping
    return [out[g, 0, : sizes[g]].astype(np.int64) for g in range(G)]


# ----------------------------------------------------------------------------
# Kernel 3: scatter-mean via in-kernel one-hot @ vals on the MXU (tiled + acc)
#   grid = (K tiles, D tiles, N reduction tiles); counts come from a ones
#   column riding in the padded lane space of the same matmul (no XLU reduce,
#   no count scratch).
# ----------------------------------------------------------------------------
def _make_segmean_kernel(tk):
    def kernel(seg_ref, v_ref, o_ref, acc_ref):
        n_red = pl.program_id(2)

        @pl.when(n_red == 0)
        def _():
            acc_ref[...] = jnp.zeros_like(acc_ref)

        seg = seg_ref[...]                                 # (1, TN) int32, pad = -1
        row_ids = (jax.lax.broadcasted_iota(jnp.int32, (tk, seg.shape[1]), 0)
                   + pl.program_id(0) * tk)
        onehot = (row_ids == seg).astype(jnp.float32)      # (TK, TN) built in-kernel
        acc_ref[...] += jnp.dot(onehot, v_ref[...],
                                preferred_element_type=jnp.float32)

        @pl.when(n_red == pl.num_programs(2) - 1)
        def _():
            o_ref[...] = acc_ref[...]
    return kernel


def segmean_pallas(vals, seg, num_seg):
    vals = jnp.asarray(vals, jnp.float32)                  # feature values stay f32 (exact)
    seg = np.asarray(seg, np.int64)
    N, D = vals.shape
    K = int(num_seg)
    TK = min(256, _rup(K, SUB)); Kp = _rup(K, TK)
    Dp = _bucket(D + 1, LANE);   TD = min(256, Dp)         # +1: counts column
    Np = _bucket(N, LANE);       TN = min(1024, Np)
    seg_pad = np.full((1, Np), -1, np.int32)
    seg_pad[0, :N] = seg.astype(np.int32)
    vals_pad = (jnp.zeros((Np, Dp), jnp.float32)
                .at[:N, :D].set(vals)
                .at[:, D].set(1.0))                        # ones column -> free counts
    out = pl.pallas_call(
        _make_segmean_kernel(TK),
        grid=(Kp // TK, Dp // TD, Np // TN),
        in_specs=[pl.BlockSpec((1, TN), lambda i, j, n: (0, n)),
                  pl.BlockSpec((TN, TD), lambda i, j, n: (n, j))],
        out_specs=pl.BlockSpec((TK, TD), lambda i, j, n: (i, j)),
        out_shape=jax.ShapeDtypeStruct((Kp, Dp), jnp.float32),
        scratch_shapes=[pltpu.VMEM((TK, TD), jnp.float32)],
        compiler_params=pltpu.CompilerParams(
            dimension_semantics=("parallel", "parallel", "arbitrary")),
    )(jnp.asarray(seg_pad), vals_pad)
    sums = out[:K, :D]
    cnt = out[:K, D:D + 1]
    return sums / jnp.maximum(cnt, 1.0)                    # device array (K, D)


# ----------------------------------------------------------------------------
# Kernel 4: pooled adjacency  A_pool = onehot @ A @ onehot^T  -- two passes:
#   pass 1: B = onehot_rows @ A      (A read from HBM exactly once)
#   pass 2: A_pool = B @ onehot_cols^T
#   bf16 operands / f32 accumulation; B kept bf16 only when exact (counts<256).
# ----------------------------------------------------------------------------
def _make_adjpool_pass1_kernel(tko):
    def kernel(seg_ref, a_ref, o_ref, acc_ref):
        u = pl.program_id(2)

        @pl.when(u == 0)
        def _():
            acc_ref[...] = jnp.zeros_like(acc_ref)

        seg = seg_ref[...]                                 # (1, TN) int32
        row_ids = (jax.lax.broadcasted_iota(jnp.int32, (tko, seg.shape[1]), 0)
                   + pl.program_id(0) * tko)
        onehot = (row_ids == seg).astype(jnp.bfloat16)     # 0/1 exact in bf16
        acc_ref[...] += jnp.dot(onehot, a_ref[...],
                                preferred_element_type=jnp.float32)

        @pl.when(u == pl.num_programs(2) - 1)
        def _():
            o_ref[...] = acc_ref[...].astype(o_ref.dtype)
    return kernel


def _make_adjpool_pass2_kernel(tko):
    def kernel(seg_ref, b_ref, o_ref, acc_ref):
        u = pl.program_id(2)

        @pl.when(u == 0)
        def _():
            acc_ref[...] = jnp.zeros_like(acc_ref)

        seg = seg_ref[...]                                 # (1, TN) int32
        col_ids = (jax.lax.broadcasted_iota(jnp.int32, (tko, seg.shape[1]), 0)
                   + pl.program_id(1) * tko)
        onehot = (col_ids == seg).astype(b_ref.dtype)      # bf16 fast path when exact
        # acc += B_tile @ onehot^T : contract last dims, no materialized transpose.
        acc_ref[...] += jax.lax.dot_general(
            b_ref[...], onehot, (((1,), (1,)), ((), ())),
            preferred_element_type=jnp.float32)

        @pl.when(u == pl.num_programs(2) - 1)
        def _():
            o_ref[...] = acc_ref[...]
    return kernel


def adjpool_pallas(edge_rows, edge_cols, n_nodes, seg, num_seg, max_in_degree):
    N = int(n_nodes)
    K = int(num_seg)
    TKO = 256 if K > 128 else 128                          # fill 256-wide MXU on v6e/v7x
    Kp = _rup(K, TKO)
    Np = _bucket(N, LANE)
    TN = min(1024, Np)
    # bf16 intermediate is exact only if per-tile edge counts stay < 256.
    mid_dtype = jnp.bfloat16 if int(max_in_degree) < 256 else jnp.float32
    seg_pad = np.full((1, Np), -1, np.int32)
    seg_pad[0, :N] = np.asarray(seg, np.int64).astype(np.int32)
    seg_dev = jnp.asarray(seg_pad)
    # Build the padded 0/1 adjacency directly in bf16 (exact for 0/1): no N x N
    # f32 materialization + re-pad/cast.
    a_pad = jnp.zeros((Np, Np), jnp.bfloat16).at[
        jnp.asarray(edge_rows), jnp.asarray(edge_cols)].set(jnp.bfloat16(1.0))

    # ---- pass 1: B = onehot_rows @ A  (A streamed exactly once) ----
    b_mid = pl.pallas_call(
        _make_adjpool_pass1_kernel(TKO),
        grid=(Kp // TKO, Np // TN, Np // TN),
        in_specs=[pl.BlockSpec((1, TN), lambda i, j, u: (0, u)),
                  pl.BlockSpec((TN, TN), lambda i, j, u: (u, j))],
        out_specs=pl.BlockSpec((TKO, TN), lambda i, j, u: (i, j)),
        out_shape=jax.ShapeDtypeStruct((Kp, Np), mid_dtype),
        scratch_shapes=[pltpu.VMEM((TKO, TN), jnp.float32)],
        compiler_params=pltpu.CompilerParams(
            dimension_semantics=("parallel", "parallel", "arbitrary")),
    )(seg_dev, a_pad)

    # ---- pass 2: A_pool = B @ onehot_cols^T ----
    out = pl.pallas_call(
        _make_adjpool_pass2_kernel(TKO),
        grid=(Kp // TKO, Kp // TKO, Np // TN),
        in_specs=[pl.BlockSpec((1, TN), lambda i, j, u: (0, u)),
                  pl.BlockSpec((TKO, TN), lambda i, j, u: (i, u))],
        out_specs=pl.BlockSpec((TKO, TKO), lambda i, j, u: (i, j)),
        out_shape=jax.ShapeDtypeStruct((Kp, Kp), jnp.float32),
        scratch_shapes=[pltpu.VMEM((TKO, TKO), jnp.float32)],
        compiler_params=pltpu.CompilerParams(
            dimension_semantics=("parallel", "parallel", "arbitrary")),
    )(seg_dev, b_mid)
    return out[:K, :K]                                     # device array (K, K)


# ----------------------------------------------------------------------------
# IHPool.forward  (select='inter', dis='ou')
# ----------------------------------------------------------------------------
def ihpool_forward(x, edge_index, node_type, tree, x_y_index, w1, w2, ratio=0.5):
    x = np.asarray(x, np.float32)
    edge_index = np.asarray(edge_index, np.int64)
    node_type = np.asarray(node_type, np.int64)
    tree = np.asarray(tree, np.int64)
    x_y_index = np.asarray(x_y_index, np.float32)

    N = x.shape[0]
    idx1 = np.where(node_type == 1)[0]
    idx2 = np.where(node_type == 2)[0]
    N_1, N_2 = len(idx1), len(idx2)

    # add_remaining_self_loops(edge_index, None, fill_value=1, num_nodes=N)
    existing = set(map(tuple, edge_index.T[edge_index[0] == edge_index[1]].tolist()))
    missing = np.array([i for i in range(N) if (i, i) not in existing], dtype=np.int64)
    edge_index = np.concatenate([edge_index, np.stack([missing, missing])], axis=1)
    edge_weight = None  # PyG returns None when input edge_weight is None

    # ---- level-1 fitness (Pallas) + threshold selection (host: sort/stride) ----
    # TODO(synk): sorting/threshold selection, set() relabeling and variable-size
    # group bookkeeping are inherently dynamic-shaped -> they stay host-side glue.
    fitness_1 = np.asarray(fitness_pallas(x[idx1], w1))
    x_y_fitness_1 = np.concatenate([x_y_index[idx1], fitness_1[:, None]], axis=-1)
    sort_idx_1 = np.argsort(fitness_1, kind="stable")
    if ratio < 1:
        step1 = int(math.ceil(N_1 / (N_1 * ratio)))
    elif N_1 < ratio:
        step1 = 1
    else:
        step1 = int(math.ceil(N_1 / ratio))
    thr_1 = x_y_fitness_1[sort_idx_1[np.arange(0, N_1, step1)]]

    # ---- cluster assignment level-1 (Pallas: pairwise dist + argmin) ----
    cluster_1 = assign_pallas_batched([thr_1], [x_y_fitness_1])[0]

    new_x_y_index_1 = segmean_pallas(x_y_index[idx1], cluster_1,
                                     int(cluster_1.max()) + 1)      # device (K1, 2)

    # ---- level-2 fitness (Pallas) ----
    fitness_2 = np.asarray(fitness_pallas(x[idx2], w2))
    x_y_fitness_2 = np.concatenate([x_y_index[idx2], fitness_2[:, None]], axis=-1)
    x_y_index_2 = x_y_index[idx2]

    tree_2 = tree[idx2]
    cluster2_from_1 = cluster_1[tree_2 - tree_2.min()]
    uniq_c1 = np.array(sorted(set(cluster_1.tolist())), dtype=np.int64)
    G2 = len(uniq_c1)

    # Pass 1 (host): per-group threshold selection -> collect padded groups.
    sel_list, thr_list, pts_list = [], [], []
    for k in range(G2):
        sel = np.where(cluster2_from_1 == uniq_c1[k])[0]
        N_k = len(sel)
        after_fit_2 = fitness_2[sel]
        after_xyf_2 = x_y_fitness_2[sel]
        sort_idx_2 = np.argsort(after_fit_2, kind="stable")
        if ratio < 1:
            step2 = int(math.ceil(N_k / (N_k * ratio)))
        elif N_k == 1:
            step2 = N_k
        else:
            step2 = N_k - 1
        thr_2 = after_xyf_2[sort_idx_2[np.arange(0, N_k, step2)]]
        sel_list.append(sel)
        thr_list.append(thr_2)
        pts_list.append(after_xyf_2)

    # ONE batched Pallas assign call for all level-2 groups.
    t_cluster_list = assign_pallas_batched(thr_list, pts_list)

    # Pass 2 (host): original bookkeeping, plus a global segment id so that a
    # single segment-mean reproduces the per-group scatter-mean concatenation.
    cluster_2 = np.zeros(N_2, dtype=np.int64)
    new_tree = np.concatenate([np.array([-1], np.int64), np.zeros(G2, np.int64)])
    gseg_2 = np.zeros(N_2, dtype=np.int64)
    g_off = 0
    for k in range(G2):
        sel = sel_list[k]
        t_cluster_2 = t_cluster_list[k]                    # raw per-group ids
        gseg_2[sel] = g_off + t_cluster_2
        g_off += int(t_cluster_2.max()) + 1
        n_sub = len(set(t_cluster_2.tolist()))
        t_cluster_off = t_cluster_2 + len(set(cluster_2.tolist())) * 2
        # NOTE: write-back mask uses == k (as in the original code); selection
        # above used == uniq_c1[k].  They coincide when level-1 ids are 0..G2-1.
        cluster_2[cluster2_from_1 == k] = t_cluster_off
        new_tree = np.concatenate([new_tree, np.full(n_sub, k + 1, np.int64)])

    # ONE segment-mean for all level-2 group means (ordering preserved by g_off).
    level2_xy_means = segmean_pallas(x_y_index_2, gseg_2, g_off)
    new_x_y_index = jnp.concatenate(
        [jnp.zeros((1, 2), jnp.float32), new_x_y_index_1, level2_xy_means], axis=0)

    cluster = np.arange(N, dtype=np.int64)
    cluster[node_type == 0] = 0
    cluster[node_type == 1] = cluster_1 + 1
    cluster[node_type == 2] = cluster_2 + len(cluster_1) + 100
    uniq = np.array(sorted(set(cluster.tolist())), dtype=np.int64)
    cluster = np.searchsorted(uniq, cluster).astype(np.int64)

    node_type_out = np.concatenate([
        np.array([0], np.int64),
        np.ones(len(set(cluster_1.tolist())), np.int64),
        np.full(len(set(cluster_2.tolist())), 2, np.int64)])

    K = int(cluster.max()) + 1
    # pooled node features (Pallas: tiled in-kernel one-hot MXU scatter-mean)
    x_pooled = segmean_pallas(x, cluster, K)

    # pooled adjacency (Pallas: two-pass onehot @ A @ onehot^T, bf16 operands)
    max_in_degree = int(np.bincount(edge_index[1], minlength=N).max())
    A_pooled = adjpool_pallas(edge_index[0], edge_index[1], N, cluster, K,
                              max_in_degree)
    A_np = np.asarray(A_pooled)
    row, col = np.where(A_np != 0)
    edge_index_out = np.stack([row, col], axis=0).astype(np.int64)

    batch = np.zeros(K, dtype=np.int64)
    fitness = np.concatenate(
        [np.zeros(1, np.float32), fitness_1.astype(np.float32),
         fitness_2.astype(np.float32)])

    return (x_pooled, edge_index_out, edge_weight, batch, cluster,
            node_type_out, new_tree, fitness, new_x_y_index)


if __name__ == "__main__":
    key = jax.random.PRNGKey(0)
    k_w1, k_w2, k_x, k_xy = jax.random.split(key, 4)

    C = 32
    N_1, N_2 = 8, 16
    N = 1 + N_1 + N_2
    ratio = 0.5

    # IHPool parameters actually used in forward: weight_1, weight_2 (1, C),
    # uniform(-1/sqrt(C), 1/sqrt(C)) as in reset_parameters (lin/att/gnn_score unused).
    bound = 1.0 / math.sqrt(C)
    w1 = jax.random.uniform(k_w1, (1, C), minval=-bound, maxval=bound, dtype=jnp.float32)
    w2 = jax.random.uniform(k_w2, (1, C), minval=-bound, maxval=bound, dtype=jnp.float32)

    x = jax.random.normal(k_x, (N, C), dtype=jnp.float32)
    x_y_index = jax.random.uniform(k_xy, (N, 2), minval=0.0, maxval=16.0,
                                   dtype=jnp.float32)

    node_type = np.array([0] + [1] * N_1 + [2] * N_2, dtype=np.int64)
    # tree: root -> -1, level-1 nodes -> 0 (root), level-2 node i -> level-1 parent id
    tree = np.array([-1] + [0] * N_1 + [1 + i // 2 for i in range(N_2)], dtype=np.int64)

    # edges: root<->level-1, level-1 parent<->level-2 child, level-2 chain
    src, dst = [], []
    for j in range(1, 1 + N_1):
        src += [0, j]; dst += [j, 0]
    for i in range(N_2):
        c = 1 + N_1 + i
        p = 1 + i // 2
        src += [p, c]; dst += [c, p]
    for i in range(N_2 - 1):
        a = 1 + N_1 + i
        src += [a, a + 1]; dst += [a + 1, a]
    edge_index = np.array([src, dst], dtype=np.int64)

    outs = ihpool_forward(np.asarray(x), edge_index, node_type, tree,
                          np.asarray(x_y_index), np.asarray(w1), np.asarray(w2),
                          ratio=ratio)
    x_pooled = outs[0]
    jax.block_until_ready(x_pooled)
    assert x_pooled.shape[1] == C and x_pooled.shape[0] == outs[5].shape[0]
    print("KERNEL_OK")
</pallas_src>

<mosaic_0001>
module attributes {stable_mosaic.version = 11 : i64} {
  func.func @_fitness_kernel(%arg0: i32, %arg1: memref<32x128xf32, #tpu.memory_space<vmem>>, %arg2: memref<32x128xf32, #tpu.memory_space<vmem>>, %arg3: memref<1x128xf32, #tpu.memory_space<vmem>>) attributes {dimension_semantics = [#tpu.dimension_semantics<parallel>], iteration_bounds = array<i64: 1>, scalar_prefetch = 0 : i64, scratch_operands = 0 : i64, tpu.core_type = #tpu.core_type<tc>, window_params = [{transform_indices = @transform_0, window_bounds = array<i64: 32, 128>}, {pipeline_mode = #tpu.pipeline_mode<synchronous>, transform_indices = @transform_1, window_bounds = array<i64: 32, 128>}, {transform_indices = @transform_2, window_bounds = array<i64: 1, 128>}]} {
    %c0 = arith.constant 0 : index
    %c0_0 = arith.constant 0 : index
    %0 = vector.load %arg2[%c0, %c0_0] : memref<32x128xf32, #tpu.memory_space<vmem>>, vector<32x1xf32>
    %c0_1 = arith.constant 0 : index
    %c0_2 = arith.constant 0 : index
    %1 = vector.load %arg1[%c0_1, %c0_2] : memref<32x128xf32, #tpu.memory_space<vmem>>, vector<32x128xf32>
    %2 = vector.broadcast %0 : vector<32x1xf32> to vector<32x128xf32>
    %3 = arith.mulf %1, %2 : vector<32x128xf32>
    %cst = arith.constant dense<0.000000e+00> : vector<128xf32>
    %4 = vector.multi_reduction <add>, %3, %cst [0] : vector<32x128xf32> to vector<128xf32>
    %5 = vector.shape_cast %4 : vector<128xf32> to vector<1x128xf32>
    %6 = math.tanh %5 : vector<1x128xf32>
    %c0_3 = arith.constant 0 : index
    %c0_4 = arith.constant 0 : index
    %7 = vector.load %arg3[%c0_3, %c0_4] : memref<1x128xf32, #tpu.memory_space<vmem>>, vector<1x128xf32>
    tpu.vector_store %arg3[%c0_3, %c0_4], %6 {strides = array<i32>} : memref<1x128xf32, #tpu.memory_space<vmem>>, vector<1x128xf32>,
    return
  }
  func.func @transform_0(%arg0: i32) -> (i32, i32) {
    %c0_i32 = arith.constant 0 : i32
    %c0_i32_0 = arith.constant 0 : i32
    return %c0_i32, %arg0 : i32, i32
  }
  func.func @transform_1(%arg0: i32) -> (i32, i32) {
    %c0_i32 = arith.constant 0 : i32
    %c0_i32_0 = arith.constant 0 : i32
    %c0_i32_1 = arith.constant 0 : i32
    return %c0_i32, %c0_i32_0 : i32, i32
  }
  func.func @transform_2(%arg0: i32) -> (i32, i32) {
    %c0_i32 = arith.constant 0 : i32
    %c0_i32_0 = arith.constant 0 : i32
    return %c0_i32, %arg0 : i32, i32
  }
}

</mosaic_0001>

<llo_original>
// kernel: tpu_custom_call.1
$region0: #{tpu_custom_call.1}
  #allocation0 [shape = 'u32[]', space=smem, size = 0x4, offset = 0x4, fixed_abs, tag = 'smem constant byte address 0x4 - core index']
  #allocation1 [shape = 'u32[72,128]{1,0:T(1,128)}', space=vmem, size = 0x9000, scoped, tag = 'internal scratch']
  %s0 = inlined_call_operand.hbm [shape: f32[32,128], index: 0, kind: input, shape index: {}]
  %s1 = inlined_call_operand.hbm [shape: f32[32,128], index: 1, kind: input, shape index: {}]
  %s2 = inlined_call_operand.hbm [shape: f32[1,128], index: 2, kind: output, shape index: {}]
  %s3 = sld [smem:[#allocation0]]
  $region26: #{tpu_custom_call.1} parent=0
    _
  %s5 = ssub.s32 1, %s3
  %s6 = scalar_select 0, %s5, %s3
  $region1: #{tpu_custom_call.1} parent=0
    #allocation2 [shape = 'u8[16384]{0}', space=vmem, size = 0x4000, scoped, tag = 'input window, operand 0, single buffered']
    #allocation3 [shape = 's32[1]{0}', space=sflag, size = 0x4, scoped, tag = 'scoped memory for tpu_custom_call.1']
    #allocation4 [shape = 's32[1]{0}', space=sflag, size = 0x4, scoped, tag = 'scoped memory for tpu_custom_call.1']
    #allocation5 [shape = 'u8[16384]{0}', space=vmem, size = 0x4000, scoped, tag = 'input window, operand 1, single buffered']
    #allocation6 [shape = 's32[1]{0}', space=sflag, size = 0x4, scoped, tag = 'scoped memory for tpu_custom_call.1']
    #allocation7 [shape = 'u8[512]{0}', space=vmem, size = 0x400, scoped, tag = 'output window, operand 0, single buffered']
    %7 = vsyncpa [#allocation3], 0
    %8 = vsyncpa [#allocation6], 0
    %9 = vsyncpa [#allocation4], 0
    // Predicated region
    $region2: #{tpu_custom_call.1} parent=1 // pred_check
      _
    $region3: #{tpu_custom_call.1} parent=1 // pred_check_branch
      %11 = sbr.rel (0) target = $region5
    $region4: #{tpu_custom_call.1} parent=1 // pred_region
      %13 = vsyncadd [#allocation3], 0
      %s14 = sshll.u32 %s0, 4
      %s15 = int_to_ptr.hbm [resolvable:$true] %s14
      %s16 = sshll.u32 [#allocation2], 4
      %s17 = int_to_ptr.vmem [resolvable:$true] %s16
      %22 = dma.hbm_to_vmem [thread:$0]  %s15, 512, %s17, [#allocation3], 128, 128, 8
    $region5: #{tpu_custom_call.1} parent=1 // pred_fallthru
      _
    // Predicated region
    $region6: #{tpu_custom_call.1} parent=1 // pred_check
      _
    $region7: #{tpu_custom_call.1} parent=1 // pred_check_branch
      %24 = sbr.rel (0) target = $region9
    $region8: #{tpu_custom_call.1} parent=1 // pred_region
      %26 = vsyncadd [#allocation6], 0
      %s27 = sshll.u32 %s1, 4
      %s28 = int_to_ptr.hbm [resolvable:$true] %s27
      %s29 = sshll.u32 [#allocation5], 4
      %s30 = int_to_ptr.vmem [resolvable:$true] %s29
      %35 = dma.hbm_to_vmem [thread:$0]  %s28, 512, %s30, [#allocation6], 128, 128, 8
    $region9: #{tpu_custom_call.1} parent=1 // pred_fallthru
      _
    // Predicated region
    $region10: #{tpu_custom_call.1} parent=1 // pred_check
      _
    $region11: #{tpu_custom_call.1} parent=1 // pred_check_branch
      %37 = sbr.rel (0) target = $region13
    $region12: #{tpu_custom_call.1} parent=1 // pred_region
      %39 = dma.done [#allocation3], 512
    $region13: #{tpu_custom_call.1} parent=1 // pred_fallthru
      _
    // Predicated region
    $region14: #{tpu_custom_call.1} parent=1 // pred_check
      _
    $region15: #{tpu_custom_call.1} parent=1 // pred_check_branch
      %41 = sbr.rel (0) target = $region17
    $region16: #{tpu_custom_call.1} parent=1 // pred_region
      %43 = dma.done [#allocation6], 512
    $region17: #{tpu_custom_call.1} parent=1 // pred_fallthru
      _
    %v44 = vld [vmem:[#allocation5] sm:$0xff]
    %v45 = vld [vmem:[#allocation5 + $0x8] sm:$0xff]
    %v46 = vld [vmem:[#allocation5 + $0x10] sm:$0xff]
    %v47 = vld [vmem:[#allocation5 + $0x18] sm:$0xff]
    %v48 = vld [vmem:[#allocation2] sm:$0xff]
    %v49 = vld [vmem:[#allocation2 + $0x8] sm:$0xff]
    %v50 = vld [vmem:[#allocation2 + $0x10] sm:$0xff]
    %v51 = vld [vmem:[#allocation2 + $0x18] sm:$0xff]
    %53 = vset.pattern.permute.xlu0 0
    %54 = vperm.xlu0 %53, %v44
    %v55 = vpop.permute.xlu0 %54
    %58 = vset.pattern.permute.xlu0 0
    %59 = vperm.xlu0 %58, %v45
    %v60 = vpop.permute.xlu0 %59
    %63 = vset.pattern.permute.xlu0 0
    %64 = vperm.xlu0 %63, %v46
    %v65 = vpop.permute.xlu0 %64
    %68 = vset.pattern.permute.xlu0 0
    %69 = vperm.xlu0 %68, %v47
    %v70 = vpop.permute.xlu0 %69
    %v72 = vmul.f32 %v48, %v55
    %v73 = vmul.f32 %v49, %v60
    %v74 = vmul.f32 %v50, %v65
    %v75 = vmul.f32 %v51, %v70
    %v76 = vadd.f32 %v72, %v73
    %v77 = vadd.f32 %v76, %v74
    %v78 = vadd.f32 %v77, %v75
    %v79 = vrot.slane %v78, 4
    %v80 = vadd.f32 %v78, %v79
    %v81 = vrot.slane %v80, 2
    %v82 = vadd.f32 %v80, %v81
    %v83 = vrot.slane %v82, 1
    %v84 = vadd.f32 %v82, %v83
    %v85 = vtanh.pop %v84
    %86 = vst [vmem:[#allocation7] sm:$0x1] %v85
    // Predicated region
    $region18: #{tpu_custom_call.1} parent=1 // pred_check
      _
    $region19: #{tpu_custom_call.1} parent=1 // pred_check_branch
      %88 = sbr.rel (0) target = $region21
    $region20: #{tpu_custom_call.1} parent=1 // pred_region
      %90 = vsyncadd [#allocation4], 0
      %s92 = sshll.u32 [#allocation7], 4
      %s93 = int_to_ptr.vmem [resolvable:$true] %s92
      %s94 = sshll.u32 %s2, 4
      %s95 = int_to_ptr.hbm [resolvable:$true] %s94
      %97 = dma.vmem_to_hbm [thread:$0]  %s93, 16, %s95, [#allocation4]
    $region21: #{tpu_custom_call.1} parent=1 // pred_fallthru
      _
    // Predicated region
    $region22: #{tpu_custom_call.1} parent=1 // pred_check
      _
    $region23: #{tpu_custom_call.1} parent=1 // pred_check_branch
      %99 = sbr.rel (0) target = $region25
    $region24: #{tpu_custom_call.1} parent=1 // pred_region
      %101 = dma.done [#allocation4], 16
    $region25: #{tpu_custom_call.1} parent=1 // pred_fallthru
      _
    %102 = vsyncpa [#allocation3], 1
    %103 = vsyncpa [#allocation6], 1
    %104 = vsyncpa [#allocation4], 1

</llo_original>
